<compile_context>
chip_gen: v6e
topology: v6e:2x2x1
jax: 0.10.0
libtpu: 0.0.40
codegen_flags: <defaults>
</compile_context>

<pallas_src>
import jax
import jax.numpy as jnp
from jax import lax
from jax.experimental import pallas as pl
from jax.experimental.pallas import tpu as pltpu


# ----------------------- input projection (all timesteps) --------------------
def _proj_kernel(x_ref, w_ref, b_ref, o_ref):
    # (T*B, D_in) @ (D_in, num_dirs*3H) + folded bias — one MXU matmul for the
    # whole sequence and both directions.
    o_ref[...] = (jnp.dot(x_ref[...], w_ref[...],
                          preferred_element_type=jnp.float32)
                  + b_ref[...]).astype(o_ref.dtype)


def input_projection(x2d, wih_t, gi_bias):
    M = x2d.shape[0]
    N = wih_t.shape[1]
    return pl.pallas_call(
        _proj_kernel,
        out_shape=jax.ShapeDtypeStruct((M, N), jnp.float32),
    )(x2d, wih_t, gi_bias)


# ------------------------------- GRU cell math --------------------------------
def _gru_cell(gi_row, base, gh, bhh_n, h, H):
    """PyTorch GRU cell (gate order r, z, n). gi_row already contains
    b_ih + b_hh(r, z) folded in; gh = h @ W_hh^T (no bias)."""
    r = jax.nn.sigmoid(gi_row[:, base:base + H] + gh[:, 0:H])
    z = jax.nn.sigmoid(gi_row[:, base + H:base + 2 * H] + gh[:, H:2 * H])
    n = jnp.tanh(gi_row[:, base + 2 * H:base + 3 * H]
                 + r * (gh[:, 2 * H:3 * H] + bhh_n))
    return (1.0 - z) * n + z * h


# ------------------- fused bidirectional GRU layer (full seq) -----------------
def _bigru_seq_kernel(gi_ref, whh_ref, bhhn_ref, out_ref, h_ref):
    T = gi_ref.shape[0]
    num_dirs, H, _ = whh_ref.shape

    h_ref[...] = jnp.zeros_like(h_ref)
    whh = [whh_ref[d] for d in range(num_dirs)]      # hoisted, loop-invariant
    bhhn = [bhhn_ref[d] for d in range(num_dirs)]

    def step(t, carry):
        for d in range(num_dirs):                    # static unroll over dirs
            tt = t if d == 0 else T - 1 - t          # direction 1 runs reversed
            gi_row = gi_ref[tt]                      # (B, num_dirs*3H)
            h = h_ref[d]                             # (B, H)
            gh = jnp.dot(h, whh[d], preferred_element_type=jnp.float32)
            h_new = _gru_cell(gi_row, d * 3 * H, gh, bhhn[d], h, H)
            h_ref[d] = h_new
            out_ref[tt, :, d * H:(d + 1) * H] = h_new.astype(out_ref.dtype)
        return carry

    lax.fori_loop(0, T, step, 0, unroll=(T <= 32))


def bigru_seq(gi, whh_t, bhh_n):
    T, B, _ = gi.shape
    num_dirs, H, _ = whh_t.shape
    return pl.pallas_call(
        _bigru_seq_kernel,
        out_shape=jax.ShapeDtypeStruct((T, B, num_dirs * H), jnp.float32),
        scratch_shapes=[pltpu.VMEM((num_dirs, B, H), jnp.float32)],
    )(gi, whh_t, bhh_n)


# ---------------- last GRU layer fused with the Linear classifier -------------
def _bigru_last_kernel(gi_ref, whh_ref, bhhn_ref, wlin_ref, blin_ref,
                       o_ref, h_ref):
    T = gi_ref.shape[0]
    num_dirs, H, _ = whh_ref.shape

    # Forward direction: full recurrence; only the final hidden state is used.
    h_ref[...] = jnp.zeros_like(h_ref)
    whh0 = whh_ref[0]
    bhhn0 = bhhn_ref[0]

    def step(t, carry):
        gi_row = gi_ref[t]
        h = h_ref[0]
        gh = jnp.dot(h, whh0, preferred_element_type=jnp.float32)
        h_ref[0] = _gru_cell(gi_row, 0, gh, bhhn0, h, H)
        return carry

    lax.fori_loop(0, T, step, 0, unroll=(T <= 32))
    h_fwd = h_ref[0]

    # Fused classifier; split matmul over the fwd/rev halves avoids a concat.
    logits = (jnp.dot(h_fwd, wlin_ref[0:H, :],
                      preferred_element_type=jnp.float32) + blin_ref[...])

    if num_dirs == 2:
        # output[:, -1, H:] is the reverse direction after processing ONLY
        # x[T-1] (its first step, previous h = 0) — a single cell update,
        # no recurrence and no h @ W_hh matmul (it is exactly zero).
        gi_row = gi_ref[T - 1]
        base = 3 * H
        r = jax.nn.sigmoid(gi_row[:, base:base + H])
        z = jax.nn.sigmoid(gi_row[:, base + H:base + 2 * H])
        n = jnp.tanh(gi_row[:, base + 2 * H:base + 3 * H] + r * bhhn_ref[1])
        h_rev = (1.0 - z) * n
        logits = logits + jnp.dot(h_rev, wlin_ref[H:2 * H, :],
                                  preferred_element_type=jnp.float32)

    o_ref[...] = logits.astype(o_ref.dtype)


def bigru_last(gi, whh_t, bhh_n, w_lin_t, b_lin):
    T, B, _ = gi.shape
    num_dirs, H, _ = whh_t.shape
    C = w_lin_t.shape[1]
    return pl.pallas_call(
        _bigru_last_kernel,
        out_shape=jax.ShapeDtypeStruct((B, C), jnp.float32),
        scratch_shapes=[pltpu.VMEM((1, B, H), jnp.float32)],
    )(gi, whh_t, bhh_n, w_lin_t, b_lin)


# ------------------------------ parameter init --------------------------------
def init_params(key, vocab, embed_dim, hidden, num_layers, bidirectional,
                num_class):
    num_dirs = 2 if bidirectional else 1
    H = hidden
    n_keys = 1 + num_layers * num_dirs * 4 + 2
    keys = iter(jax.random.split(key, n_keys))

    params = {
        "hidden": hidden,
        "num_layers": num_layers,
        "num_dirs": num_dirs,
        "embeddings": jax.random.normal(next(keys), (vocab, embed_dim),
                                        jnp.float32),
        "layers": [],
    }
    k = 1.0 / float(hidden) ** 0.5
    for layer in range(num_layers):
        d_in = embed_dim if layer == 0 else hidden * num_dirs
        wih_cols, gi_bias_cols, whh_list, bhhn_list = [], [], [], []
        for _ in range(num_dirs):
            wih_t = jax.random.uniform(next(keys), (d_in, 3 * H), jnp.float32,
                                       -k, k)
            whh_t = jax.random.uniform(next(keys), (H, 3 * H), jnp.float32,
                                       -k, k)
            bih = jax.random.uniform(next(keys), (3 * H,), jnp.float32, -k, k)
            bhh = jax.random.uniform(next(keys), (3 * H,), jnp.float32, -k, k)
            # Fold b_hh for the r and z gates into the input-projection bias;
            # only b_hh_n must stay inside the recurrence (inside r*(...)).
            folded = bih + jnp.concatenate(
                [bhh[:2 * H], jnp.zeros((H,), jnp.float32)])
            wih_cols.append(wih_t)
            gi_bias_cols.append(folded)
            whh_list.append(whh_t)
            bhhn_list.append(bhh[2 * H:].reshape(1, H))
        params["layers"].append({
            "wih_t": jnp.concatenate(wih_cols, axis=1),     # (d_in, nd*3H)
            "gi_bias": jnp.concatenate(gi_bias_cols).reshape(1, num_dirs * 3 * H),
            "whh_t": jnp.stack(whh_list, axis=0),           # (nd, H, 3H)
            "bhh_n": jnp.stack(bhhn_list, axis=0),          # (nd, 1, H)
        })

    lin_in = hidden * num_dirs
    kl = 1.0 / float(lin_in) ** 0.5
    params["w_lin_t"] = jax.random.uniform(next(keys), (lin_in, num_class),
                                           jnp.float32, -kl, kl)
    params["b_lin"] = jax.random.uniform(next(keys), (1, num_class),
                                         jnp.float32, -kl, kl)
    return params


# ---------------------------------- forward -----------------------------------
def seq_classifier_forward(params, batch_ids):
    # Embedding lookup (plain-JAX gather glue): (B, T) -> (B, T, D).
    emb = jnp.take(params["embeddings"], batch_ids, axis=0)
    # nn.Dropout in eval mode is identity.
    # Single small transpose to time-major; every layer then stays time-major,
    # so no further transposes/concats are materialized between layers.
    x = jnp.transpose(emb, (1, 0, 2))                 # (T, B, D)
    T, B, _ = x.shape
    H = params["hidden"]
    num_dirs = params["num_dirs"]
    num_layers = params["num_layers"]

    logits = None
    for layer in range(num_layers):
        lp = params["layers"][layer]
        d_in = x.shape[-1]
        # Hoisted input projection for ALL timesteps + both directions.
        gi = input_projection(x.reshape(T * B, d_in), lp["wih_t"], lp["gi_bias"])
        gi = gi.reshape(T, B, num_dirs * 3 * H)
        if layer < num_layers - 1:
            x = bigru_seq(gi, lp["whh_t"], lp["bhh_n"])   # (T, B, nd*H)
        else:
            # Last layer: recurrence + last-timestep select + Linear, fused.
            logits = bigru_last(gi, lp["whh_t"], lp["bhh_n"],
                                params["w_lin_t"], params["b_lin"])
    return logits


if __name__ == "__main__":
    vocab, embed_dim, hidden = 32, 16, 32
    num_layers, bidirectional, num_class = 2, True, 10
    B, T = 2, 8

    key = jax.random.PRNGKey(0)
    k_params, k_ids = jax.random.split(key)
    params = init_params(k_params, vocab, embed_dim, hidden,
                         num_layers, bidirectional, num_class)
    batch = jax.random.randint(k_ids, (B, T), 0, vocab)

    logits = seq_classifier_forward(params, batch)
    jax.block_until_ready(logits)
    assert logits.shape == (B, num_class), logits.shape
    assert logits.dtype == jnp.float32
    print("KERNEL_OK")
</pallas_src>

<mosaic_0001>
module attributes {stable_mosaic.version = 11 : i64} {
  func.func @_proj_kernel(%arg0: memref<16x16xf32, #tpu.memory_space<vmem>>, %arg1: memref<16x192xf32, #tpu.memory_space<vmem>>, %arg2: memref<1x192xf32, #tpu.memory_space<vmem>>, %arg3: memref<16x192xf32, #tpu.memory_space<vmem>>) attributes {dimension_semantics = [], scalar_prefetch = 0 : i64, scratch_operands = 0 : i64, tpu.core_type = #tpu.core_type<tc>} {
    %c0 = arith.constant 0 : index
    %c0_0 = arith.constant 0 : index
    %0 = vector.load %arg0[%c0, %c0_0] : memref<16x16xf32, #tpu.memory_space<vmem>>, vector<16x16xf32>
    %c0_1 = arith.constant 0 : index
    %c0_2 = arith.constant 0 : index
    %1 = vector.load %arg1[%c0_1, %c0_2] : memref<16x192xf32, #tpu.memory_space<vmem>>, vector<16x192xf32>
    %cst = arith.constant dense<0.000000e+00> : vector<16x192xf32>
    %2 = tpu.matmul %0, %1, %cst {dimension_numbers = #tpu.dot_dimension_numbers<[1], [0], [0], [1], [0, 0, 1, 1], [], []>} : vector<16x16xf32>, vector<16x192xf32>, vector<16x192xf32> -> vector<16x192xf32>
    %c0_3 = arith.constant 0 : index
    %c0_4 = arith.constant 0 : index
    %3 = vector.load %arg2[%c0_3, %c0_4] : memref<1x192xf32, #tpu.memory_space<vmem>>, vector<1x192xf32>
    %4 = vector.broadcast %3 : vector<1x192xf32> to vector<16x192xf32>
    %5 = arith.addf %2, %4 : vector<16x192xf32>
    %c0_5 = arith.constant 0 : index
    %c0_6 = arith.constant 0 : index
    %6 = vector.load %arg3[%c0_5, %c0_6] : memref<16x192xf32, #tpu.memory_space<vmem>>, vector<16x192xf32>
    tpu.vector_store %arg3[%c0_5, %c0_6], %5 {strides = array<i32>} : memref<16x192xf32, #tpu.memory_space<vmem>>, vector<16x192xf32>,
    return
  }
}

</mosaic_0001>

<llo_original>
// kernel: tpu_custom_call.1
$region0: #{tpu_custom_call.1}
  #allocation0 [shape = 'u32[]', space=smem, size = 0x4, offset = 0x4, fixed_abs, tag = 'smem constant byte address 0x4 - core index']
  #allocation1 [shape = 'u32[144,128]{1,0:T(1,128)}', space=vmem, size = 0x12000, scoped, tag = 'internal scratch']
  %s0 = inlined_call_operand.hbm [shape: f32[16,16], index: 0, kind: input, shape index: {}]
  %s1 = inlined_call_operand.hbm [shape: f32[16,192], index: 1, kind: input, shape index: {}]
  %s2 = inlined_call_operand.vmem [shape: f32[1,192], index: 2, kind: input, shape index: {}]
  %s3 = inlined_call_operand.hbm [shape: f32[16,192], index: 3, kind: output, shape index: {}]
  %s4 = sld [smem:[#allocation0]]
  $region30: #{tpu_custom_call.1} parent=0
    _
  %s6 = ssub.s32 1, %s4
  %s7 = scalar_select 0, %s6, %s4
  $region1: #{tpu_custom_call.1} parent=0
    #allocation2 [shape = 'u8[8192]{0}', space=vmem, size = 0x2000, scoped, tag = 'input window, operand 0, single buffered']
    #allocation3 [shape = 's32[1]{0}', space=sflag, size = 0x4, scoped, tag = 'scoped memory for tpu_custom_call.1']
    #allocation4 [shape = 's32[1]{0}', space=sflag, size = 0x4, scoped, tag = 'scoped memory for tpu_custom_call.1']
    #allocation5 [shape = 'u8[16384]{0}', space=vmem, size = 0x4000, scoped, tag = 'input window, operand 1, single buffered']
    #allocation6 [shape = 's32[1]{0}', space=sflag, size = 0x4, scoped, tag = 'scoped memory for tpu_custom_call.1']
    #allocation7 [shape = 'u8[16384]{0}', space=vmem, size = 0x4000, scoped, tag = 'output window, operand 0, single buffered']
    %8 = vsyncpa [#allocation3], 0
    %9 = vsyncpa [#allocation6], 0
    %10 = vsyncpa [#allocation4], 0
    // Predicated region
    $region2: #{tpu_custom_call.1} parent=1 // pred_check
      _
    $region3: #{tpu_custom_call.1} parent=1 // pred_check_branch
      %12 = sbr.rel (0) target = $region5
    $region4: #{tpu_custom_call.1} parent=1 // pred_region
      %s14 = ssub.s32 256, 256
      %15 = vsyncadd [#allocation3], %s14
      %s16 = sshll.u32 [#allocation2], 4
      %s17 = int_to_ptr.vmem [resolvable:$true] %s16
      %22 = dma.hbm_to_vmem [thread:$0]  %s0, 256, %s17, [#allocation3], 128, 128, 8
    $region5: #{tpu_custom_call.1} parent=1 // pred_fallthru
      _
    // Predicated region
    $region6: #{tpu_custom_call.1} parent=1 // pred_check
      _
    $region7: #{tpu_custom_call.1} parent=1 // pred_check_branch
      %24 = sbr.rel (0) target = $region9
    $region8: #{tpu_custom_call.1} parent=1 // pred_region
      %s26 = ssub.s32 512, 512
      %27 = vsyncadd [#allocation6], %s26
      %s28 = sshll.u32 [#allocation5], 4
      %s29 = int_to_ptr.vmem [resolvable:$true] %s28
      %34 = dma.hbm_to_vmem [thread:$0]  %s1, 512, %s29, [#allocation6], 256, 256, 16
    $region9: #{tpu_custom_call.1} parent=1 // pred_fallthru
      _
    // Predicated region
    $region10: #{tpu_custom_call.1} parent=1 // pred_check
      _
    $region11: #{tpu_custom_call.1} parent=1 // pred_check_branch
      %36 = sbr.rel (0) target = $region13
    $region12: #{tpu_custom_call.1} parent=1 // pred_region
      _
    $region13: #{tpu_custom_call.1} parent=1 // pred_fallthru
      _
    // Predicated region
    $region14: #{tpu_custom_call.1} parent=1 // pred_check
      _
    $region15: #{tpu_custom_call.1} parent=1 // pred_check_branch
      %38 = sbr.rel (0) target = $region17
    $region16: #{tpu_custom_call.1} parent=1 // pred_region
      %39 = dma.done [#allocation3], 256
    $region17: #{tpu_custom_call.1} parent=1 // pred_fallthru
      _
    // Predicated region
    $region18: #{tpu_custom_call.1} parent=1 // pred_check
      _
    $region19: #{tpu_custom_call.1} parent=1 // pred_check_branch
      %41 = sbr.rel (0) target = $region21
    $region20: #{tpu_custom_call.1} parent=1 // pred_region
      %42 = dma.done [#allocation6], 512
    $region21: #{tpu_custom_call.1} parent=1 // pred_fallthru
      _
    %v43 = vld [vmem:[#allocation2] sm:$0xff]
    %v44 = vld [vmem:[#allocation2 + $0x8] sm:$0xff]
    %v45 = vld [vmem:[#allocation5] sm:$0xff]
    %v46 = vld [vmem:[#allocation5 + $0x8] sm:$0xff]
    %v47 = vld [vmem:[#allocation5 + $0x10] sm:$0xff]
    %v48 = vld [vmem:[#allocation5 + $0x18] sm:$0xff]
    %v49 = vld [vmem:[%s2] sm:$0x3]
    %v51 = vlaneseq
    %v52 = vshrl.u32 %v51, 7
    %v53 = vsub.s32 0, %v52
    %v54 = vrot.slane %v49, %v53
    %v55 = vlaneseq
    %v56 = vshrl.u32 %v55, 7
    %v57 = vsub.s32 1, %v56
    %v58 = vrot.slane %v49, %v57
    %vm61 = vcmask 130048
    %v63 = vsel %vm61, %v43, 0
    %v66 = vsel %vm61, %v44, 0
    %68 = vmatprep.subr.mxu0 0.0
    %69 = vmatpush1.msra.mxu0 0.0
    %70 = vmatprep.subr.mxu0 0.0
    %71 = vmatpush1.msra.mxu0 0.0
    %72 = vmatprep.subr.mxu0 0.0
    %73 = vmatpush1.msra.mxu0 0.0
    %74 = vmatprep.subr.mxu0 0.0
    %75 = vmatpush1.msra.mxu0 0.0
    %76 = vmatprep.subr.mxu0 0.0
    %77 = vmatpush1.msra.mxu0 0.0
    %78 = vmatprep.subr.mxu0 0.0
    %79 = vmatpush1.msra.mxu0 0.0
    %80 = vmatprep.subr.mxu0 0.0
    %81 = vmatpush1.msra.mxu0 0.0
    %82 = vmatprep.subr.mxu0 0.0
    %83 = vmatpush1.msra.mxu0 0.0
    %84 = vmatprep.subr.mxu0 0.0
    %85 = vmatpush1.msra.mxu0 0.0
    %86 = vmatprep.subr.mxu0 0.0
    %87 = vmatpush1.msra.mxu0 0.0
    %88 = vmatprep.subr.mxu0 0.0
    %89 = vmatpush1.msra.mxu0 0.0
    %90 = vmatprep.subr.mxu0 0.0
    %91 = vmatpush1.msra.mxu0 0.0
    %92 = vmatprep.subr.mxu0 0.0
    %93 = vmatpush1.msra.mxu0 0.0
    %94 = vmatprep.subr.mxu0 0.0
    %95 = vmatpush1.msra.mxu0 0.0
    %96 = vmatprep.subr.mxu0 %v48
    %97 = vmatpush1.msra.mxu0 %v47
    %98 = vmatprep.subr.mxu0 %v46
    %99 = vmatpush1.msra.mxu0 %v45
    %100 = vmatprep.subr.mxu0 0.0
    %101 = vmatpush2.msra.mxu0 0.0
    %102 = vmatprep.subr.mxu0 0.0
    %103 = vmatpush2.msra.mxu0 0.0
    %104 = vmatprep.subr.mxu0 0.0
    %105 = vmatpush2.msra.mxu0 0.0
    %106 = vmatprep.subr.mxu0 0.0
    %107 = vmatpush2.msra.mxu0 0.0
    %108 = vmatprep.subr.mxu0 0.0
    %109 = vmatpush2.msra.mxu0 0.0
    %110 = vmatprep.subr.mxu0 0.0
    %111 = vmatpush2.msra.mxu0 0.0
    %112 = vmatprep.subr.mxu0 0.0
    %113 = vmatpush2.msra.mxu0 0.0
    %114 = vmatprep.subr.mxu0 0.0
    %115 = vmatpush2.msra.mxu0 0.0
    %116 = vmatprep.subr.mxu0 0.0
    %117 = vmatpush2.msra.mxu0 0.0
    %118 = vmatprep.subr.mxu0 0.0
    %119 = vmatpush2.msra.mxu0 0.0
    %120 = vmatprep.subr.mxu0 0.0
    %121 = vmatpush2.msra.mxu0 0.0
    %122 = vmatprep.subr.mxu0 0.0
    %123 = vmatpush2.msra.mxu0 0.0
    %124 = vmatprep.subr.mxu0 0.0
    %125 = vmatpush2.msra.mxu0 0.0
    %126 = vmatprep.subr.mxu0 0.0
    %127 = vmatpush2.msra.mxu0 0.0
    %128 = vmatprep.subr.mxu0 0.0
    %129 = vmatpush2.msra.mxu0 0.0
    %130 = vmatprep.subr.mxu0 0.0
    %131 = vmatpush2.msra.mxu0 0.0
    %132 = vmatprep.mubr.f32.mxu0 0.0
    %133 = vmatmul.mubr.f32.gmra.mxu0 %v63
    %v134 = vpop.f32.mrf.mxu0
    %v135 = vadd.f32 %v54, %v134
    %v136 = vpop.f32.mrf.mxu0
    %v137 = vadd.f32 %v58, %v136
    %138 = vmatprep.mubr.f32.mxu0 0.0
    %139 = vmatmul.mubr.f32.gmra.mxu0 %v66
    %v140 = vpop.f32.mrf.mxu0
    %v141 = vadd.f32 %v54, %v140
    %v142 = vpop.f32.mrf.mxu0
    %v143 = vadd.f32 %v58, %v142
    %144 = vdwg.mxu0
    %145 = vst [vmem:[#allocation7] sm:$0xff] %v135
    %vm146 = vcmask 523264
    %147 = vst.msk [vmem:[#allocation7 + $0x8] sm:$0xff] %vm146, %v137
    %148 = vst [vmem:[#allocation7 + $0x10] sm:$0xff] %v141
    %149 = vst.msk [vmem:[#allocation7 + $0x18] sm:$0xff] %vm146, %v143
    // Predicated region
    $region22: #{tpu_custom_call.1} parent=1 // pred_check
      _
    $region23: #{tpu_custom_call.1} parent=1 // pred_check_branch
      %151 = sbr.rel (0) target = $region25
    $region24: #{tpu_custom_call.1} parent=1 // pred_region
      %s153 = ssub.s32 512, 512
      %154 = vsyncadd [#allocation4], %s153
      %s155 = sshll.u32 [#allocation7], 4
      %s156 = int_to_ptr.vmem [resolvable:$true] %s155
      %161 = dma.vmem_to_hbm [thread:$0]  %s156, 512, %s3, [#allocation4], 256, 256, 16
    $region25: #{tpu_custom_call.1} parent=1 // pred_fallthru
      _
    // Predicated region
    $region26: #{tpu_custom_call.1} parent=1 // pred_check
      _
    $region27: #{tpu_custom_call.1} parent=1 // pred_check_branch
      %163 = sbr.rel (0) target = $region29
    $region28: #{tpu_custom_call.1} parent=1 // pred_region
      %164 = dma.done [#allocation4], 512
    $region29: #{tpu_custom_call.1} parent=1 // pred_fallthru
      _
    %165 = vsyncpa [#allocation3], 1
    %166 = vsyncpa [#allocation6], 1
    %167 = vsyncpa [#allocation4], 1

</llo_original>
